<compile_context>
chip_gen: v6e
topology: v6e:2x2x1
jax: 0.10.0
libtpu: 0.0.40
codegen_flags: <defaults>
</compile_context>

<pallas_src>
import jax
import jax.numpy as jnp
from jax import lax
from jax.experimental import pallas as pl
from jax.experimental.pallas import tpu as pltpu

_SINGLE_STEP_MAX_ROWS = 1024   # below this, one grid step (latency-dominated)


def _round_up(x: int, m: int) -> int:
    return ((x + m - 1) // m) * m


def cam_param_kernel(x_ref, w12t_ref, w3t_ref, out_ref):
    """Two MXU matmuls; layer_1 and both biases are pre-folded into weights.

    x_ref:    (TB, Kp)  flattened joints + constant-1 column (+ zero pad)
    w12t_ref: (Hp, Kp)  fused (layer_1 . layer_2 + biases), transposed
    w3t_ref:  (8,  Hp)  layer_3 weights + bias row, padded to 8 output rows
    out_ref:  (8,  TB)  camera params in rows 0..2, batch on lanes
    """
    # Contract the shared feature axis (last dim of both operands) so the
    # batch lands on lanes: h_t[m, b] = sum_k W12a[k, m] * x_aug[b, k].
    h_t = lax.dot_general(
        w12t_ref[...], x_ref[...],
        dimension_numbers=(((1,), (1,)), ((), ())),
        preferred_element_type=jnp.float32)                      # (Hp, TB) f32
    # layer_3 (+ bias): standard (M,K)x(K,N) matmul; output stays lane-dense.
    o_t = jnp.dot(w3t_ref[...], h_t, preferred_element_type=jnp.float32)  # (8, TB)
    out_ref[...] = o_t.astype(out_ref.dtype)


def _choose_tiling(batch, *, block_b, sublane, per_row_bytes, weight_bytes,
                   min_grid_steps, vmem_budget_bytes):
    """Return (tile_rows, padded_batch, grid_steps)."""
    # Rows/step allowed by the VMEM budget (double-buffered x & out blocks +
    # the f32 intermediate + resident weights); stays under v5e's 16 MiB
    # scoped-VMEM default with headroom.
    tb_budget = max(sublane, (vmem_budget_bytes - weight_bytes) // per_row_bytes)
    tb_cap = max(sublane, min(int(block_b), int(tb_budget)))
    b_single = _round_up(batch, sublane)
    if b_single <= min(tb_cap, _SINGLE_STEP_MAX_ROWS):
        return b_single, b_single, 1          # small-B fast path: one grid step
    # Multi-step: the tile must be a multiple of 128 so the transposed (8, TB)
    # output block is lane-dense and satisfies the (8, 128) block constraint.
    tb_cap = max(128, (tb_cap // 128) * 128)
    n_steps = max(pl.cdiv(batch, tb_cap), min_grid_steps)  # >=2 uses both v7x TCs
    tile = min(tb_cap, _round_up(pl.cdiv(batch, n_steps), 128))
    b_pad = _round_up(batch, tile)
    return tile, b_pad, b_pad // tile


def cam_param_fc(x, params, *, compute_dtype="auto", block_b=4096,
                 min_grid_steps=2, vmem_budget_bytes=10 * 1024 * 1024):
    """x: (B, J, 3) -> (B, 3) (squeezed like PyTorch, so (3,) if B == 1)."""
    B, J, C = x.shape
    assert C == 3
    w1, b1 = params["w1"], params["b1"]          # (1, 3), (1,)
    w2, b2 = params["w2"], params["b2"]          # (H, J), (H,)
    w3, b3 = params["w3"], params["b3"]          # (3, H), (3,)
    H = w2.shape[0]
    K = 3 * J
    Kp = _round_up(K + 1, 8)     # flattened joints + constant-1 column, padded
    Hp = _round_up(H + 1, 8)     # hidden + constant-carrier row, padded

    if compute_dtype == "auto":  # bf16 inputs for large f32 batches
        compute_dtype = jnp.bfloat16 if (B >= 2048 and x.dtype == jnp.float32) else None
    cdt = jnp.dtype(x.dtype if compute_dtype is None else compute_dtype)
    out_dtype = x.dtype

    # --- static weight prep (plain JAX; constant-folds under jit) ----------
    # Fold layer_1 into layer_2 and both biases into the matmuls:
    #   h[b,m] = sum_{j,c} x[b,j,c]*w1[c]*w2[m,j] + (b2[m] + b1*sum_j w2[m,j])
    # The constant-1 input column feeds the bias row; w12a[K, H] = 1 carries
    # the constant through to h so b3 rides an extra row of W3.
    f32 = jnp.float32
    w1v = jnp.reshape(w1, (3,)).astype(f32)
    w2f = w2.astype(f32)
    w12 = (w2f.T[:, None, :] * w1v[None, :, None]).reshape(K, H)      # (K, H)
    b12 = b2.astype(f32) + jnp.reshape(b1, ()).astype(f32) * jnp.sum(w2f, axis=1)
    w12a = jnp.zeros((Kp, Hp), f32)
    w12a = w12a.at[:K, :H].set(w12).at[K, :H].set(b12).at[K, H].set(1.0)
    w12t = w12a.T.astype(cdt)                                         # (Hp, Kp)

    w3t = jnp.zeros((8, Hp), f32)                                     # stays f32
    w3t = w3t.at[:3, :H].set(w3.astype(f32)).at[:3, H].set(b3.astype(f32))

    # --- batch tiling (VMEM-budgeted, lane-dense multiples of 128) ----------
    in_isz = cdt.itemsize
    out_isz = jnp.dtype(out_dtype).itemsize
    sublane = max(8, 32 // in_isz)                 # 8 (f32) / 16 (bf16)
    per_row = 2 * Kp * in_isz + 2 * 8 * out_isz + Hp * 4 + 8 * 4
    w_bytes = 2 * (Hp * Kp * in_isz + 8 * Hp * 4)
    TB, B_pad, n_steps = _choose_tiling(
        B, block_b=block_b, sublane=sublane, per_row_bytes=per_row,
        weight_bytes=w_bytes, min_grid_steps=min_grid_steps,
        vmem_budget_bytes=vmem_budget_bytes)

    # --- dense (B_pad, Kp) input: flattened joints + constant-1 column ------
    x2a = jnp.zeros((B_pad, Kp), cdt)
    x2a = x2a.at[:B, :K].set(x.reshape(B, K).astype(cdt))
    x2a = x2a.at[:B, K].set(jnp.ones((B,), cdt))

    cost = pl.CostEstimate(
        flops=2 * B_pad * Kp * Hp + 2 * B_pad * Hp * 8,
        transcendentals=0,
        bytes_accessed=(B_pad * Kp * in_isz + 8 * B_pad * out_isz
                        + Hp * Kp * in_isz + 8 * Hp * 4))

    out_t = pl.pallas_call(
        cam_param_kernel,
        out_shape=jax.ShapeDtypeStruct((8, B_pad), out_dtype),
        grid_spec=pltpu.PrefetchScalarGridSpec(
            num_scalar_prefetch=0,
            grid=(n_steps,),
            in_specs=[
                pl.BlockSpec((TB, Kp), lambda i: (i, 0)),   # x tile (batch rows)
                pl.BlockSpec((Hp, Kp), lambda i: (0, 0)),   # fused W12^T (resident)
                pl.BlockSpec((8, Hp), lambda i: (0, 0)),    # fused W3^T (resident)
            ],
            out_specs=pl.BlockSpec((8, TB), lambda i: (0, i)),
        ),
        compiler_params=pltpu.CompilerParams(
            dimension_semantics=("parallel",)),             # megacore on v7x
        cost_estimate=cost,
    )(x2a, w12t, w3t)

    out = out_t[:3, :B].T            # (B, 3): drop the 8-row and batch padding
    # PyTorch .squeeze(): (B, 3, 1) -> (B, 3), and (3,) when B == 1 (kept to
    # match the module exactly; note the B == 1 shape hazard for callers).
    return jnp.squeeze(out)


def init_params(key, num_joints, hidden=150):
    """Deterministic init matching nn.Linear shapes (U(-1/sqrt(fan_in), ...))."""
    ks = jax.random.split(key, 6)

    def lin(kw, kb, out_f, in_f):
        bound = 1.0 / jnp.sqrt(in_f)
        w = jax.random.uniform(kw, (out_f, in_f), jnp.float32, -bound, bound)
        b = jax.random.uniform(kb, (out_f,), jnp.float32, -bound, bound)
        return w, b

    w1, b1 = lin(ks[0], ks[1], 1, 3)                 # layer_1: Linear(3, 1)
    w2, b2 = lin(ks[2], ks[3], hidden, num_joints)   # layer_2: Linear(J, H)
    w3, b3 = lin(ks[4], ks[5], 3, hidden)            # layer_3: Linear(H, 3)
    return dict(w1=w1, b1=b1, w2=w2, b2=b2, w3=w3, b3=b3)


def cam_param_fc_ref(x, params):
    """Pure-JAX reference mirroring the PyTorch forward."""
    w1, b1 = params["w1"], params["b1"]
    w2, b2 = params["w2"], params["b2"]
    w3, b3 = params["w3"], params["b3"]
    y = x @ w1.T + b1                 # (B, J, 1)
    y = jnp.swapaxes(y, 1, 2)         # (B, 1, J)
    y = y @ w2.T + b2                 # (B, 1, H)
    y = y @ w3.T + b3                 # (B, 1, 3)
    y = jnp.swapaxes(y, 1, 2)         # (B, 3, 1)
    return jnp.squeeze(y)             # (B, 3)


if __name__ == "__main__":
    key = jax.random.PRNGKey(0)
    kx, kp, kx2 = jax.random.split(key, 3)

    # Small shapes consistent with the module: batch=2, num_joints=8, hidden=32.
    B, J, H = 2, 8, 32
    x = jax.random.normal(kx, (B, J, 3), jnp.float32)
    params = init_params(kp, num_joints=J, hidden=H)

    out = jax.block_until_ready(cam_param_fc(x, params))
    ref = cam_param_fc_ref(x, params)
    assert out.shape == ref.shape == (B, 3), (out.shape, ref.shape)
    assert jnp.allclose(out, ref, atol=1e-5, rtol=1e-5), (out, ref)

    # Multi-step grid path: B=300, block_b=128 -> 3 "parallel" steps of 128
    # rows each, with batch padding to 384 and lane-dense (8, 128) output blocks.
    B2 = 300
    x_big = jax.random.normal(kx2, (B2, J, 3), jnp.float32)
    out_big = jax.block_until_ready(cam_param_fc(x_big, params, block_b=128))
    ref_big = cam_param_fc_ref(x_big, params)
    assert out_big.shape == ref_big.shape == (B2, 3)
    assert jnp.allclose(out_big, ref_big, atol=1e-4, rtol=1e-4)

    # bf16-input / f32-accumulate path: check against the f32 reference with a
    # tolerance appropriate for bf16-rounded inputs/weights.
    out_bf16 = jax.block_until_ready(
        cam_param_fc(x_big, params, compute_dtype=jnp.bfloat16, block_b=128))
    assert out_bf16.shape == (B2, 3)
    assert bool(jnp.all(jnp.isfinite(out_bf16)))
    assert jnp.allclose(out_bf16, ref_big, atol=5e-2, rtol=5e-2)

    print("KERNEL_OK")
</pallas_src>

<mosaic_0001>
module attributes {stable_mosaic.version = 11 : i64} {
  func.func @cam_param_kernel(%arg0: i32, %arg1: memref<8x32xf32, #tpu.memory_space<vmem>>, %arg2: memref<40x32xf32, #tpu.memory_space<vmem>>, %arg3: memref<8x40xf32, #tpu.memory_space<vmem>>, %arg4: memref<8x8xf32, #tpu.memory_space<vmem>>) attributes {dimension_semantics = [#tpu.dimension_semantics<parallel>], iteration_bounds = array<i64: 1>, scalar_prefetch = 0 : i64, scratch_operands = 0 : i64, tpu.core_type = #tpu.core_type<tc>, window_params = [{transform_indices = @transform_0, window_bounds = array<i64: 8, 32>}, {pipeline_mode = #tpu.pipeline_mode<synchronous>, transform_indices = @transform_1, window_bounds = array<i64: 40, 32>}, {pipeline_mode = #tpu.pipeline_mode<synchronous>, transform_indices = @transform_2, window_bounds = array<i64: 8, 40>}, {transform_indices = @transform_3, window_bounds = array<i64: 8, 8>}]} {
    %c0 = arith.constant 0 : index
    %c0_0 = arith.constant 0 : index
    %0 = vector.load %arg2[%c0, %c0_0] : memref<40x32xf32, #tpu.memory_space<vmem>>, vector<40x32xf32>
    %c0_1 = arith.constant 0 : index
    %c0_2 = arith.constant 0 : index
    %1 = vector.load %arg1[%c0_1, %c0_2] : memref<8x32xf32, #tpu.memory_space<vmem>>, vector<8x32xf32>
    %cst = arith.constant dense<0.000000e+00> : vector<40x8xf32>
    %2 = tpu.matmul %0, %1, %cst {dimension_numbers = #tpu.dot_dimension_numbers<[1], [1], [0], [0], [0, 0, 1, 0], [], []>} : vector<40x32xf32>, vector<8x32xf32>, vector<40x8xf32> -> vector<40x8xf32>
    %c0_3 = arith.constant 0 : index
    %c0_4 = arith.constant 0 : index
    %3 = vector.load %arg3[%c0_3, %c0_4] : memref<8x40xf32, #tpu.memory_space<vmem>>, vector<8x40xf32>
    %cst_5 = arith.constant dense<0.000000e+00> : vector<8x8xf32>
    %4 = tpu.matmul %3, %2, %cst_5 {dimension_numbers = #tpu.dot_dimension_numbers<[1], [0], [0], [1], [0, 0, 1, 1], [], []>} : vector<8x40xf32>, vector<40x8xf32>, vector<8x8xf32> -> vector<8x8xf32>
    %c0_6 = arith.constant 0 : index
    %c0_7 = arith.constant 0 : index
    %5 = vector.load %arg4[%c0_6, %c0_7] : memref<8x8xf32, #tpu.memory_space<vmem>>, vector<8x8xf32>
    tpu.vector_store %arg4[%c0_6, %c0_7], %4 {strides = array<i32>} : memref<8x8xf32, #tpu.memory_space<vmem>>, vector<8x8xf32>,
    return
  }
  func.func @transform_0(%arg0: i32) -> (i32, i32) {
    %c0_i32 = arith.constant 0 : i32
    %c0_i32_0 = arith.constant 0 : i32
    return %arg0, %c0_i32 : i32, i32
  }
  func.func @transform_1(%arg0: i32) -> (i32, i32) {
    %c0_i32 = arith.constant 0 : i32
    %c0_i32_0 = arith.constant 0 : i32
    %c0_i32_1 = arith.constant 0 : i32
    return %c0_i32, %c0_i32_0 : i32, i32
  }
  func.func @transform_2(%arg0: i32) -> (i32, i32) {
    %c0_i32 = arith.constant 0 : i32
    %c0_i32_0 = arith.constant 0 : i32
    %c0_i32_1 = arith.constant 0 : i32
    return %c0_i32, %c0_i32_0 : i32, i32
  }
  func.func @transform_3(%arg0: i32) -> (i32, i32) {
    %c0_i32 = arith.constant 0 : i32
    %c0_i32_0 = arith.constant 0 : i32
    return %c0_i32, %arg0 : i32, i32
  }
}

</mosaic_0001>

<llo_original>
// kernel: tpu_custom_call.1
$region0: #{tpu_custom_call.1}
  #allocation0 [shape = 'u32[]', space=smem, size = 0x4, offset = 0x4, fixed_abs, tag = 'smem constant byte address 0x4 - core index']
  #allocation1 [shape = 'u32[144,128]{1,0:T(1,128)}', space=vmem, size = 0x12000, scoped, tag = 'internal scratch']
  %s0 = inlined_call_operand.vmem [shape: f32[8,32], index: 0, kind: input, shape index: {}]
  %s1 = inlined_call_operand.vmem [shape: f32[40,32], index: 1, kind: input, shape index: {}]
  %s2 = inlined_call_operand.vmem [shape: f32[8,40], index: 2, kind: input, shape index: {}]
  %s3 = inlined_call_operand.hbm [shape: f32[8,8], index: 3, kind: output, shape index: {}]
  %s4 = sld [smem:[#allocation0]]
  $region22: #{tpu_custom_call.1} parent=0
    _
  %s6 = ssub.s32 1, %s4
  %s7 = scalar_select 0, %s6, %s4
  $region1: #{tpu_custom_call.1} parent=0
    #allocation2 [shape = 'u8[4096]{0}', space=vmem, size = 0x1000, scoped, tag = 'output window, operand 0, single buffered']
    #allocation3 [shape = 's32[1]{0}', space=sflag, size = 0x4, scoped, tag = 'scoped memory for tpu_custom_call.1']
    %8 = vsyncpa [#allocation3], 0
    // Predicated region
    $region2: #{tpu_custom_call.1} parent=1 // pred_check
      _
    $region3: #{tpu_custom_call.1} parent=1 // pred_check_branch
      %10 = sbr.rel (0) target = $region5
    $region4: #{tpu_custom_call.1} parent=1 // pred_region
      _
    $region5: #{tpu_custom_call.1} parent=1 // pred_fallthru
      _
    // Predicated region
    $region6: #{tpu_custom_call.1} parent=1 // pred_check
      _
    $region7: #{tpu_custom_call.1} parent=1 // pred_check_branch
      %12 = sbr.rel (0) target = $region9
    $region8: #{tpu_custom_call.1} parent=1 // pred_region
      _
    $region9: #{tpu_custom_call.1} parent=1 // pred_fallthru
      _
    // Predicated region
    $region10: #{tpu_custom_call.1} parent=1 // pred_check
      _
    $region11: #{tpu_custom_call.1} parent=1 // pred_check_branch
      %14 = sbr.rel (0) target = $region13
    $region12: #{tpu_custom_call.1} parent=1 // pred_region
      _
    $region13: #{tpu_custom_call.1} parent=1 // pred_fallthru
      _
    %v15 = vld [vmem:[%s1] sm:$0xff]
    %v16 = vld [vmem:[%s1 + $0x8] sm:$0xff]
    %v17 = vld [vmem:[%s1 + $0x10] sm:$0xff]
    %v18 = vld [vmem:[%s1 + $0x18] sm:$0xff]
    %v19 = vld [vmem:[%s1 + $0x20] sm:$0xff]
    %v20 = vld [vmem:[%s0] sm:$0xff]
    %vm21 = vcmask 261120
    %v23 = vsel %vm21, %v15, 0
    %v26 = vsel %vm21, %v16, 0
    %v29 = vsel %vm21, %v17, 0
    %v32 = vsel %vm21, %v18, 0
    %v35 = vsel %vm21, %v19, 0
    %v38 = vsel %vm21, %v20, 0
    %40 = vmatprep.subr.mxu0 0.0
    %41 = vmatpush1.xpose.msra.mxu0 0.0
    %42 = vmatprep.subr.mxu0 0.0
    %43 = vmatpush1.xpose.msra.mxu0 0.0
    %44 = vmatprep.subr.mxu0 0.0
    %45 = vmatpush1.xpose.msra.mxu0 0.0
    %46 = vmatprep.subr.mxu0 0.0
    %47 = vmatpush1.xpose.msra.mxu0 0.0
    %48 = vmatprep.subr.mxu0 0.0
    %49 = vmatpush1.xpose.msra.mxu0 0.0
    %50 = vmatprep.subr.mxu0 0.0
    %51 = vmatpush1.xpose.msra.mxu0 0.0
    %52 = vmatprep.subr.mxu0 0.0
    %53 = vmatpush1.xpose.msra.mxu0 0.0
    %54 = vmatprep.subr.mxu0 0.0
    %55 = vmatpush1.xpose.msra.mxu0 0.0
    %56 = vmatprep.subr.mxu0 0.0
    %57 = vmatpush1.xpose.msra.mxu0 0.0
    %58 = vmatprep.subr.mxu0 0.0
    %59 = vmatpush1.xpose.msra.mxu0 0.0
    %60 = vmatprep.subr.mxu0 0.0
    %61 = vmatpush1.xpose.msra.mxu0 0.0
    %62 = vmatprep.subr.mxu0 0.0
    %63 = vmatpush1.xpose.msra.mxu0 0.0
    %64 = vmatprep.subr.mxu0 0.0
    %65 = vmatpush1.xpose.msra.mxu0 0.0
    %66 = vmatprep.subr.mxu0 0.0
    %67 = vmatpush1.xpose.msra.mxu0 0.0
    %68 = vmatprep.subr.mxu0 0.0
    %69 = vmatpush1.xpose.msra.mxu0 0.0
    %70 = vmatprep.subr.mxu0 0.0
    %71 = vmatpush1.xpose.msra.mxu0 %v38
    %72 = vmatprep.subr.mxu0 0.0
    %73 = vmatpush2.xpose.msra.mxu0 0.0
    %74 = vmatprep.subr.mxu0 0.0
    %75 = vmatpush2.xpose.msra.mxu0 0.0
    %76 = vmatprep.subr.mxu0 0.0
    %77 = vmatpush2.xpose.msra.mxu0 0.0
    %78 = vmatprep.subr.mxu0 0.0
    %79 = vmatpush2.xpose.msra.mxu0 0.0
    %80 = vmatprep.subr.mxu0 0.0
    %81 = vmatpush2.xpose.msra.mxu0 0.0
    %82 = vmatprep.subr.mxu0 0.0
    %83 = vmatpush2.xpose.msra.mxu0 0.0
    %84 = vmatprep.subr.mxu0 0.0
    %85 = vmatpush2.xpose.msra.mxu0 0.0
    %86 = vmatprep.subr.mxu0 0.0
    %87 = vmatpush2.xpose.msra.mxu0 0.0
    %88 = vmatprep.subr.mxu0 0.0
    %89 = vmatpush2.xpose.msra.mxu0 0.0
    %90 = vmatprep.subr.mxu0 0.0
    %91 = vmatpush2.xpose.msra.mxu0 0.0
    %92 = vmatprep.subr.mxu0 0.0
    %93 = vmatpush2.xpose.msra.mxu0 0.0
    %94 = vmatprep.subr.mxu0 0.0
    %95 = vmatpush2.xpose.msra.mxu0 0.0
    %96 = vmatprep.subr.mxu0 0.0
    %97 = vmatpush2.xpose.msra.mxu0 0.0
    %98 = vmatprep.subr.mxu0 0.0
    %99 = vmatpush2.xpose.msra.mxu0 0.0
    %100 = vmatprep.subr.mxu0 0.0
    %101 = vmatpush2.xpose.msra.mxu0 0.0
    %102 = vmatprep.subr.mxu0 0.0
    %103 = vmatpush2.xpose.msra.mxu0 0.0
    %104 = vmatprep.mubr.f32.mxu0 0.0
    %105 = vmatmul.mubr.f32.gmra.mxu0 %v23
    %v106 = vpop.f32.mrf.mxu0
    %v107 = vadd.f32 0.0, %v106
    %v108 = vpop.f32.mrf.mxu0
    %109 = vmatprep.mubr.f32.mxu0 0.0
    %110 = vmatmul.mubr.f32.gmra.mxu0 %v26
    %v111 = vpop.f32.mrf.mxu0
    %v112 = vadd.f32 0.0, %v111
    %v113 = vpop.f32.mrf.mxu0
    %114 = vmatprep.mubr.f32.mxu0 0.0
    %115 = vmatmul.mubr.f32.gmra.mxu0 %v29
    %v116 = vpop.f32.mrf.mxu0
    %v117 = vadd.f32 0.0, %v116
    %v118 = vpop.f32.mrf.mxu0
    %119 = vmatprep.mubr.f32.mxu0 0.0
    %120 = vmatmul.mubr.f32.gmra.mxu0 %v32
    %v121 = vpop.f32.mrf.mxu0
    %v122 = vadd.f32 0.0, %v121
    %v123 = vpop.f32.mrf.mxu0
    %124 = vmatprep.mubr.f32.mxu0 0.0
    %125 = vmatmul.mubr.f32.gmra.mxu0 %v35
    %v126 = vpop.f32.mrf.mxu0
    %v127 = vadd.f32 0.0, %v126
    %v128 = vpop.f32.mrf.mxu0
    %129 = vdwg.mxu0
    %v130 = vld [vmem:[%s2] sm:$0xff]
    %vm131 = vcmask 326656
    %v133 = vsel %vm131, %v130, 0
    %135 = vmatprep.subr.mxu0 0.0
    %136 = vmatpush1.msra.mxu0 0.0
    %137 = vmatprep.subr.mxu0 0.0
    %138 = vmatpush1.msra.mxu0 0.0
    %139 = vmatprep.subr.mxu0 0.0
    %140 = vmatpush1.msra.mxu0 0.0
    %141 = vmatprep.subr.mxu0 0.0
    %142 = vmatpush1.msra.mxu0 0.0
    %143 = vmatprep.subr.mxu0 0.0
    %144 = vmatpush1.msra.mxu0 0.0
    %145 = vmatprep.subr.mxu0 0.0
    %146 = vmatpush1.msra.mxu0 0.0
    %147 = vmatprep.subr.mxu0 0.0
    %148 = vmatpush1.msra.mxu0 0.0
    %149 = vmatprep.subr.mxu0 0.0
    %150 = vmatpush1.msra.mxu0 0.0
    %151 = vmatprep.subr.mxu0 0.0
    %152 = vmatpush1.msra.mxu0 0.0
    %153 = vmatprep.subr.mxu0 0.0
    %154 = vmatpush1.msra.mxu0 0.0
    %155 = vmatprep.subr.mxu0 0.0
    %156 = vmatpush1.msra.mxu0 0.0
    %157 = vmatprep.subr.mxu0 0.0
    %158 = vmatpush1.msra.mxu0 %v127
    %159 = vmatprep.subr.mxu0 0.0
    %160 = vmatpush1.msra.mxu0 %v122
    %161 = vmatprep.subr.mxu0 0.0
    %162 = vmatpush1.msra.mxu0 %v117
    %163 = vmatprep.subr.mxu0 0.0
    %164 = vmatpush1.msra.mxu0 %v112
    %165 = vmatprep.subr.mxu0 0.0
    %166 = vmatpush1.msra.mxu0 %v107
    %167 = vmatprep.subr.mxu0 0.0
    %168 = vmatpush2.msra.mxu0 0.0
    %169 = vmatprep.subr.mxu0 0.0
    %170 = vmatpush2.msra.mxu0 0.0
    %171 = vmatprep.subr.mxu0 0.0
    %172 = vmatpush2.msra.mxu0 0.0
    %173 = vmatprep.subr.mxu0 0.0
    %174 = vmatpush2.msra.mxu0 0.0
    %175 = vmatprep.subr.mxu0 0.0
    %176 = vmatpush2.msra.mxu0 0.0
    %177 = vmatprep.subr.mxu0 0.0
    %178 = vmatpush2.msra.mxu0 0.0
    %179 = vmatprep.subr.mxu0 0.0
    %180 = vmatpush2.msra.mxu0 0.0
    %181 = vmatprep.subr.mxu0 0.0
    %182 = vmatpush2.msra.mxu0 0.0
    %183 = vmatprep.subr.mxu0 0.0
    %184 = vmatpush2.msra.mxu0 0.0
    %185 = vmatprep.subr.mxu0 0.0
    %186 = vmatpush2.msra.mxu0 0.0
    %187 = vmatprep.subr.mxu0 0.0
    %188 = vmatpush2.msra.mxu0 0.0
    %189 = vmatprep.subr.mxu0 0.0
    %190 = vmatpush2.msra.mxu0 0.0
    %191 = vmatprep.subr.mxu0 0.0
    %192 = vmatpush2.msra.mxu0 0.0
    %193 = vmatprep.subr.mxu0 0.0
    %194 = vmatpush2.msra.mxu0 0.0
    %195 = vmatprep.subr.mxu0 0.0
    %196 = vmatpush2.msra.mxu0 0.0
    %197 = vmatprep.subr.mxu0 0.0
    %198 = vmatpush2.msra.mxu0 0.0
    %199 = vmatprep.mubr.f32.mxu0 0.0
    %200 = vmatmul.mubr.f32.gmra.mxu0 %v133
    %v201 = vpop.f32.mrf.mxu0
    %v202 = vadd.f32 0.0, %v201
    %v203 = vpop.f32.mrf.mxu0
    %204 = vdwg.mxu0
    %vm205 = vcmask 64512
    %206 = vst.msk [vmem:[#allocation2] sm:$0xff] %vm205, %v202
    // Predicated region
    $region14: #{tpu_custom_call.1} parent=1 // pred_check
      _
    $region15: #{tpu_custom_call.1} parent=1 // pred_check_branch
      %208 = sbr.rel (0) target = $region17
    $region16: #{tpu_custom_call.1} parent=1 // pred_region
      %s210 = ssub.s32 128, 128
      %211 = vsyncadd [#allocation3], %s210
      %s213 = sshll.u32 [#allocation2], 4
      %s214 = int_to_ptr.vmem [resolvable:$true] %s213
      %216 = dma.vmem_to_hbm [thread:$0]  %s214, 128, %s3, [#allocation3]
    $region17: #{tpu_custom_call.1} parent=1 // pred_fallthru
      _
    // Predicated region
    $region18: #{tpu_custom_call.1} parent=1 // pred_check
      _
    $region19: #{tpu_custom_call.1} parent=1 // pred_check_branch
      %218 = sbr.rel (0) target = $region21
    $region20: #{tpu_custom_call.1} parent=1 // pred_region
      %219 = dma.done [#allocation3], 128
    $region21: #{tpu_custom_call.1} parent=1 // pred_fallthru
      _
    %220 = vsyncpa [#allocation3], 1

</llo_original>
